<compile_context>
chip_gen: v6e
topology: v6e:2x2x1
jax: 0.10.0
libtpu: 0.0.40
codegen_flags: <defaults>
</compile_context>

<pallas_src>
import math

import jax
import jax.numpy as jnp
from jax.experimental import pallas as pl
from jax.experimental.pallas import tpu as pltpu

THRESH = 6.0
_ACT_OFFSET = THRESH - math.log(1.5 * THRESH + 1.0)

# Taps that are structurally non-zero under HiddenLayer's weight_sharing initialisation
# (initialise_weights + mask_weights guarantee every other tap stays exactly 0).
_V0_TAPS_2D = ((1, 1),)                                   # centre only (1x1 conv)
_T0_TAPS_2D = ((1, 1), (0, 1), (1, 0), (1, 2), (2, 1))    # centre + 4-neighbour cross
_V1_TAPS_1D = (0,)                                        # Conv1d k=1
_T1_TAPS_1D = (0, 1, 2)                                   # Conv1d k=3 (all taps live)


# ----------------------------- Pallas kernel --------------------------------
def _fused_act_matmul_kernel(w_ref, p_ref, o_ref):
    """o = act(w @ p); w:(Cout, K), p:(K, tm), o:(Cout, tm) lane-dense."""
    acc = jnp.dot(w_ref[...], p_ref[...], preferred_element_type=jnp.float32)
    x = jnp.maximum(acc, 0.0)                               # relu / clamp(x, 0)
    x = jnp.where(x >= THRESH, jnp.log(1.5 * x + 1.0) + _ACT_OFFSET, x)
    o_ref[...] = x.astype(o_ref.dtype)


def fused_act_matmul(w, p, *, tile_m=512, out_dtype=jnp.float32):
    """act(w @ p) with w:(N, K), p:(K, M); the M (lane) axis is tiled over the grid."""
    N, K = w.shape
    Kp, M = p.shape
    assert K == Kp
    # Lane-axis tile: multiple of 128. tile_m=512 keeps >= 2 grid steps at typical sizes
    # (v7x megacore sharding via "parallel") while staying near the HBM-roofline knee.
    tm = min(tile_m, pl.cdiv(M, 128) * 128)
    m_pad = pl.cdiv(M, tm) * tm
    if m_pad != M:
        p = jnp.pad(p, ((0, 0), (0, m_pad - M)))
    grid = (m_pad // tm,)

    # Explicit VMEM budget with headroom (scoped default differs per generation and
    # v7x only has 64 MiB physical VMEM per TensorCore).
    p_bytes = jnp.dtype(p.dtype).itemsize
    w_bytes = jnp.dtype(w.dtype).itemsize
    need = 2 * K * tm * p_bytes + 2 * N * tm * 4 + N * K * w_bytes
    vmem_limit = int(min(48 * 1024 * 1024, max(16 * 1024 * 1024, 4 * need)))

    out = pl.pallas_call(
        _fused_act_matmul_kernel,
        out_shape=jax.ShapeDtypeStruct((N, m_pad), out_dtype),
        grid=grid,
        in_specs=[
            pl.BlockSpec((N, K), lambda i: (0, 0)),     # stacked weights (resident)
            pl.BlockSpec((K, tm), lambda i: (0, i)),    # patch columns, lane-tiled
        ],
        out_specs=pl.BlockSpec((N, tm), lambda i: (0, i)),
        compiler_params=pltpu.CompilerParams(
            dimension_semantics=("parallel",),
            vmem_limit_bytes=vmem_limit,
        ),
    )(w, p)
    return out[:, :M]


# ------------------------------ JAX glue -------------------------------------
def _taps2d_T(x_nchw, taps):
    """NCHW -> (len(taps)*Cin, B*H*W) shifted-view rows, 'same' padding (k=3)."""
    B, C, H, W = x_nchw.shape
    xp = jnp.pad(x_nchw, ((0, 0), (0, 0), (1, 1), (1, 1)))
    rows = [jnp.transpose(xp[:, :, kh:kh + H, kw:kw + W], (1, 0, 2, 3)).reshape(C, B * H * W)
            for kh, kw in taps]
    return jnp.concatenate(rows, axis=0)


def _taps1d_T(x_ncl, taps, k):
    """NCL -> (len(taps)*Cin, B*L) shifted-view rows, 'same' padding."""
    B, C, L = x_ncl.shape
    pad = k // 2
    xp = jnp.pad(x_ncl, ((0, 0), (0, 0), (pad, pad)))
    rows = [jnp.transpose(xp[:, :, t:t + L], (1, 0, 2)).reshape(C, B * L) for t in taps]
    return jnp.concatenate(rows, axis=0)


def _w2d_T(w_oihw, taps):
    """(Cout, Cin, kh, kw) -> (Cout, len(taps)*Cin) matching _taps2d_T row order."""
    return jnp.concatenate([w_oihw[:, :, kh, kw] for kh, kw in taps], axis=1)


def _w1d_T(w_oik, taps):
    """(Cout, Cin, k) -> (Cout, len(taps)*Cin) matching _taps1d_T row order."""
    return jnp.concatenate([w_oik[:, :, t] for t in taps], axis=1)


def hidden_layer_forward(params, lower_y, lower_ymod, *, compute_dtype=jnp.bfloat16):
    """HiddenLayer.forward (weight_sharing=True, has_Ymod=False).

    Returns [current_y (B,Cout,G,G), current_y_disk (B,Cout,L)].
    """
    x2_v, x1_v = lower_y
    x2_t, x1_t = lower_ymod
    B, Cin, G, _ = x2_v.shape
    L = x1_v.shape[2]
    Cout = params["v0_w"].shape[0]
    m2 = B * G * G
    m1 = B * L

    # Stacked weights: per branch [v-taps | t-taps | bias-column]; branches side by side.
    w2 = jnp.concatenate([_w2d_T(params["v0_w"], _V0_TAPS_2D),
                          _w2d_T(params["t0_w"], _T0_TAPS_2D),
                          params["t0_b"][:, None]], axis=1)                # (Cout, K2)
    w1 = jnp.concatenate([_w1d_T(params["v1_w"], _V1_TAPS_1D),
                          _w1d_T(params["t1_w"], _T1_TAPS_1D),
                          params["t1_b"][:, None]], axis=1)                # (Cout, K1)
    k2, k1 = w2.shape[1], w1.shape[1]
    w = jnp.concatenate([w2, w1], axis=1).astype(compute_dtype)            # (Cout, K2+K1)

    # Block-diagonal patch matrix [[P2, 0], [0, P1]] -> one matmul serves both branches.
    p2 = jnp.concatenate([_taps2d_T(x2_v, _V0_TAPS_2D),
                          _taps2d_T(x2_t, _T0_TAPS_2D),
                          jnp.ones((1, m2), x2_v.dtype)], axis=0)          # (K2, m2)
    p1 = jnp.concatenate([_taps1d_T(x1_v, _V1_TAPS_1D, 1),
                          _taps1d_T(x1_t, _T1_TAPS_1D, 3),
                          jnp.ones((1, m1), x1_v.dtype)], axis=0)          # (K1, m1)
    p = jnp.concatenate(
        [jnp.concatenate([p2, jnp.zeros((k2, m1), p2.dtype)], axis=1),
         jnp.concatenate([jnp.zeros((k1, m2), p1.dtype), p1], axis=1)],
        axis=0).astype(compute_dtype)                                      # (K2+K1, m2+m1)

    y = fused_act_matmul(w, p)                                             # (Cout, m2+m1)

    current_y = jnp.transpose(y[:, :m2].reshape(Cout, B, G, G), (1, 0, 2, 3))      # NCHW
    current_y_disk = jnp.transpose(y[:, m2:m2 + m1].reshape(Cout, B, L), (1, 0, 2))  # NCL
    # TODO(synk): has_Ymod=True path (gating_function * (u/umod + t)) not exercised; it
    # would reuse the same fused lane-dense matmul+activation kernel with extra operands.
    return [current_y, current_y_disk]


# ------------------------- deterministic parameters ---------------------------
def init_params(key, feature_in, feature_out):
    r = 0.1  # initialisation_range
    ks = jax.random.split(key, 8)
    # v[0]: Conv2d, weight_sharing, connections_to_neighbours=False -> only centre tap
    v0_w = jnp.zeros((feature_out, feature_in, 3, 3), jnp.float32)
    v0_w = v0_w.at[:, :, 1, 1].set(r * jax.random.uniform(ks[0], (feature_out, feature_in)))
    # t[0]: Conv2d, centre + 4-neighbour cross taps, bias
    t0_w = jnp.zeros((feature_out, feature_in, 3, 3), jnp.float32)
    t0_w = t0_w.at[:, :, 1, 1].set(r * jax.random.uniform(ks[1], (feature_out, feature_in)))
    rows = jnp.array([0, 1, 1, 2]); cols = jnp.array([1, 0, 2, 1])
    t0_w = t0_w.at[:, :, rows, cols].set(
        r * jax.random.uniform(ks[2], (feature_out, feature_in, 4)))
    t0_b = r * jax.random.uniform(ks[3], (feature_out,))
    # v[1]: Conv1d k=1, disk=True -> fully random, no bias
    v1_w = r * jax.random.uniform(ks[4], (feature_out, feature_in, 1))
    # t[1]: Conv1d k=3, marker=True -> all taps random, bias random
    t1_w = r * jax.random.uniform(ks[5], (feature_out, feature_in, 3))
    t1_b = r * jax.random.uniform(ks[6], (feature_out,))
    return dict(v0_w=v0_w, t0_w=t0_w, t0_b=t0_b, v1_w=v1_w, t1_w=t1_w, t1_b=t1_b)


# ------------------------------ pure-JAX reference ----------------------------
def _act_ref(x):
    x = jnp.maximum(x, 0.0)
    return jnp.where(x >= THRESH, jnp.log(1.5 * x + 1.0) + _ACT_OFFSET, x)


def _forward_ref(params, lower_y, lower_ymod):
    c2 = lambda x, w: jax.lax.conv_general_dilated(
        x, w, (1, 1), "SAME", dimension_numbers=("NCHW", "OIHW", "NCHW"))
    c1 = lambda x, w: jax.lax.conv_general_dilated(
        x, w, (1,), "SAME", dimension_numbers=("NCH", "OIH", "NCH"))
    y = _act_ref(c2(lower_y[0], params["v0_w"])
                 + c2(lower_ymod[0], params["t0_w"])
                 + params["t0_b"][None, :, None, None])
    yd = _act_ref(c1(lower_y[1], params["v1_w"])
                  + c1(lower_ymod[1], params["t1_w"])
                  + params["t1_b"][None, :, None])
    return [y, yd]


# ----------------------------------- main -------------------------------------
if __name__ == "__main__":
    B, Cin, Cout, G, L = 2, 4, 8, 16, 8
    key = jax.random.PRNGKey(0)
    kp, k1, k2, k3, k4 = jax.random.split(key, 5)
    params = init_params(kp, Cin, Cout)

    # inputs: lower_y / lower_ymod are pairs [2D grid (NCHW), 1D disk (NCL)]
    lower_y = [jax.random.normal(k1, (B, Cin, G, G), jnp.float32),
               jax.random.normal(k2, (B, Cin, L), jnp.float32)]
    lower_ymod = [jax.random.normal(k3, (B, Cin, G, G), jnp.float32),
                  jax.random.normal(k4, (B, Cin, L), jnp.float32)]

    out = hidden_layer_forward(params, lower_y, lower_ymod)
    out = jax.block_until_ready(out)

    ref = _forward_ref(params, lower_y, lower_ymod)
    assert out[0].shape == (B, Cout, G, G) and out[1].shape == (B, Cout, L)
    # bf16 matmul operands (f32 accumulation): allow bf16-level operand rounding error.
    assert jnp.allclose(out[0], ref[0], atol=2e-2, rtol=2e-2)
    assert jnp.allclose(out[1], ref[1], atol=2e-2, rtol=2e-2)

    print("KERNEL_OK")
</pallas_src>

<mosaic_0001>
module attributes {stable_mosaic.version = 11 : i64} {
  func.func @_fused_act_matmul_kernel(%arg0: i32, %arg1: memref<8x42xbf16, #tpu.memory_space<vmem>>, %arg2: memref<42x512xbf16, #tpu.memory_space<vmem>>, %arg3: memref<8x512xf32, #tpu.memory_space<vmem>>) attributes {dimension_semantics = [#tpu.dimension_semantics<parallel>], iteration_bounds = array<i64: 2>, scalar_prefetch = 0 : i64, scratch_operands = 0 : i64, tpu.core_type = #tpu.core_type<tc>, window_params = [{pipeline_mode = #tpu.pipeline_mode<synchronous>, transform_indices = @transform_0, window_bounds = array<i64: 8, 42>}, {transform_indices = @transform_1, window_bounds = array<i64: 42, 512>}, {transform_indices = @transform_2, window_bounds = array<i64: 8, 512>}]} {
    %c0 = arith.constant 0 : index
    %c0_0 = arith.constant 0 : index
    %0 = vector.load %arg1[%c0, %c0_0] : memref<8x42xbf16, #tpu.memory_space<vmem>>, vector<8x42xbf16>
    %c0_1 = arith.constant 0 : index
    %c0_2 = arith.constant 0 : index
    %1 = vector.load %arg2[%c0_1, %c0_2] : memref<42x512xbf16, #tpu.memory_space<vmem>>, vector<42x512xbf16>
    %cst = arith.constant dense<0.000000e+00> : vector<8x512xf32>
    %2 = tpu.matmul %0, %1, %cst {dimension_numbers = #tpu.dot_dimension_numbers<[1], [0], [0], [1], [0, 0, 1, 1], [], []>} : vector<8x42xbf16>, vector<42x512xbf16>, vector<8x512xf32> -> vector<8x512xf32>
    %cst_3 = arith.constant 0.000000e+00 : f32
    %3 = vector.broadcast %cst_3 : f32 to vector<8x512xf32>
    %4 = arith.maximumf %2, %3 : vector<8x512xf32>
    %cst_4 = arith.constant 6.000000e+00 : f32
    %5 = vector.broadcast %cst_4 : f32 to vector<8x512xf32>
    %6 = arith.cmpf oge, %4, %5 : vector<8x512xf32>
    %cst_5 = arith.constant 1.500000e+00 : f32
    %7 = vector.broadcast %cst_5 : f32 to vector<8x512xf32>
    %8 = arith.mulf %7, %4 : vector<8x512xf32>
    %cst_6 = arith.constant 1.000000e+00 : f32
    %9 = vector.broadcast %cst_6 : f32 to vector<8x512xf32>
    %10 = arith.addf %8, %9 : vector<8x512xf32>
    %11 = math.log %10 : vector<8x512xf32>
    %cst_7 = arith.constant 3.69741488 : f32
    %12 = vector.broadcast %cst_7 : f32 to vector<8x512xf32>
    %13 = arith.addf %11, %12 : vector<8x512xf32>
    %14 = arith.select %6, %13, %4 : vector<8x512xi1>, vector<8x512xf32>
    %c0_8 = arith.constant 0 : index
    %c0_9 = arith.constant 0 : index
    %15 = vector.load %arg3[%c0_8, %c0_9] : memref<8x512xf32, #tpu.memory_space<vmem>>, vector<8x512xf32>
    tpu.vector_store %arg3[%c0_8, %c0_9], %14 {strides = array<i32>} : memref<8x512xf32, #tpu.memory_space<vmem>>, vector<8x512xf32>,
    return
  }
  func.func @transform_0(%arg0: i32) -> (i32, i32) {
    %c0_i32 = arith.constant 0 : i32
    %c0_i32_0 = arith.constant 0 : i32
    %c0_i32_1 = arith.constant 0 : i32
    return %c0_i32, %c0_i32_0 : i32, i32
  }
  func.func @transform_1(%arg0: i32) -> (i32, i32) {
    %c0_i32 = arith.constant 0 : i32
    %c0_i32_0 = arith.constant 0 : i32
    return %c0_i32, %arg0 : i32, i32
  }
  func.func @transform_2(%arg0: i32) -> (i32, i32) {
    %c0_i32 = arith.constant 0 : i32
    %c0_i32_0 = arith.constant 0 : i32
    return %c0_i32, %arg0 : i32, i32
  }
}

</mosaic_0001>

<llo_original>
// kernel: tpu_custom_call.1
$region0: #{tpu_custom_call.1}
  #allocation0 [shape = 'u32[]', space=smem, size = 0x4, offset = 0x4, fixed_abs, tag = 'smem constant byte address 0x4 - core index']
  #allocation1 [shape = 'u32[144,128]{1,0:T(1,128)}', space=vmem, size = 0x12000, scoped, tag = 'internal scratch']
  %s0 = inlined_call_operand.hbm [shape: bf16[8,42], index: 0, kind: input, shape index: {}]
  %s1 = inlined_call_operand.hbm [shape: bf16[42,1024], index: 1, kind: input, shape index: {}]
  %s2 = inlined_call_operand.hbm [shape: f32[8,1024], index: 2, kind: output, shape index: {}]
  %s3 = sld [smem:[#allocation0]]
  $region49: #{tpu_custom_call.1} parent=0
    _
  %s5 = ssub.s32 1, %s3
  %s6 = scalar_select 0, %s5, %s3
  $region1: #{tpu_custom_call.1} parent=0
    #allocation2 [shape = 'u8[2048]{0}', space=vmem, size = 0x800, scoped, tag = 'input window, operand 0, single buffered']
    #allocation3 [shape = 's32[2]{0}', space=sflag, size = 0x8, scoped, tag = 'scoped memory for tpu_custom_call.1']
    #allocation4 [shape = 's32[2]{0}', space=sflag, size = 0x8, scoped, tag = 'scoped memory for tpu_custom_call.1']
    #allocation5 [shape = 'u8[98304]{0}', space=vmem, size = 0x18000, scoped, tag = 'input window, operand 1']
    #allocation6 [shape = 's32[2]{0}', space=sflag, size = 0x8, scoped, tag = 'scoped memory for tpu_custom_call.1']
    #allocation7 [shape = 'u8[32768]{0}', space=vmem, size = 0x8000, scoped, tag = 'output window, operand 0']
    %7 = vsyncpa [#allocation3], 0
    %8 = vsyncpa [#allocation6], 0
    %s9 = scalar_lea.sflag [#allocation6], 1
    %10 = vsyncpa %s9, 0
    %11 = vsyncpa [#allocation4], 0
    %s12 = scalar_lea.sflag [#allocation4], 1
    %13 = vsyncpa %s12, 0
    loop: start=0, step=1, limit=4
    $region2: #{tpu_custom_call.1} parent=1 // loop_pre_header
      _
    $region3: #{tpu_custom_call.1} parent=1 // loop_header
      %s15 = sphi 0, %s19
      %p16 = scmp.ge.s32.totalorder %s15, 4
      %s23 = sphi 0, %s23
      %s25 = sphi 0, %s23
      %s26 = sphi 0, %s25
      %s40 = sphi 0, %s26
      %s46 = sphi 0, %s48
      %s49 = sphi 0, %s46
      %s50 = sphi 0, %s49
      %s66 = sphi 0, %s50
      %s72 = sphi 0, %s74
      %s75 = sphi 0, %s72
      %s76 = sphi 0, %s75
      %s92 = sphi 0, %s76
    $region4: #{tpu_custom_call.1} parent=1 // loop_header_branch
      %18 = sbr.rel (%p16) target = $region8
    $region5: #{tpu_custom_call.1} parent=1 // loop_body
      %s20 = ssub.s32 %s15, 1
      %s21 = ssub.s32 %s15, 2
      %s22 = sadd.s32 %s15, 1
      %s24 = sadd.s32 %s23, 1
      %p27 = scmp.eq.s32.totalorder %s15, 1
      %p28 = scmp.ne.s32.totalorder %s23, %s25
      %p29 = scmp.eq.s32.totalorder %s15, 0
      %p30 = por %p28, %p29
      %p31 = scmp.ne.s32.totalorder %s23, %s25
      %p32 = scmp.eq.s32.totalorder %s20, 1
      %p33 = por %p31, %p32
      %p34 = scmp.ne.s32.totalorder %s25, %s26
      %p35 = scmp.eq.s32.totalorder %s20, 0
      %p36 = por %p34, %p35
      %p37 = scmp.ne.s32.totalorder %s25, %s26
      %p38 = scmp.eq.s32.totalorder %s21, 1
      %p39 = por %p37, %p38
      %p41 = scmp.ne.s32.totalorder %s26, %s40
      %p42 = scmp.eq.s32.totalorder %s21, 0
      %p43 = por %p41, %p42
      %s44 = ssub.s32 %s15, %s22
      %p45 = scmp.eq.s32.totalorder %s44, 0
      %s47 = sadd.s32 %s46, 1
      %s48 = scalar_select %p45, %s46, %s47
      %p51 = pneg %p45
      %p52 = scmp.eq.s32.totalorder %s15, 1
      %p53 = por %p51, %p52
      %p54 = scmp.ne.s32.totalorder %s46, %s49
      %p55 = scmp.eq.s32.totalorder %s15, 0
      %p56 = por %p54, %p55
      %p57 = scmp.ne.s32.totalorder %s46, %s49
      %p58 = scmp.eq.s32.totalorder %s20, 1
      %p59 = por %p57, %p58
      %p60 = scmp.ne.s32.totalorder %s49, %s50
      %p61 = scmp.eq.s32.totalorder %s20, 0
      %p62 = por %p60, %p61
      %p63 = scmp.ne.s32.totalorder %s49, %s50
      %p64 = scmp.eq.s32.totalorder %s21, 1
      %p65 = por %p63, %p64
      %p67 = scmp.ne.s32.totalorder %s50, %s66
      %p68 = scmp.eq.s32.totalorder %s21, 0
      %p69 = por %p67, %p68
      %s70 = ssub.s32 %s15, %s22
      %p71 = scmp.eq.s32.totalorder %s70, 0
      %s73 = sadd.s32 %s72, 1
      %s74 = scalar_select %p71, %s72, %s73
      %p77 = pneg %p71
      %p78 = scmp.eq.s32.totalorder %s15, 1
      %p79 = por %p77, %p78
      %p80 = scmp.ne.s32.totalorder %s72, %s75
      %p81 = scmp.eq.s32.totalorder %s15, 0
      %p82 = por %p80, %p81
      %p83 = scmp.ne.s32.totalorder %s72, %s75
      %p84 = scmp.eq.s32.totalorder %s20, 1
      %p85 = por %p83, %p84
      %p86 = scmp.ne.s32.totalorder %s75, %s76
      %p87 = scmp.eq.s32.totalorder %s20, 0
      %p88 = por %p86, %p87
      %p89 = scmp.ne.s32.totalorder %s75, %s76
      %p90 = scmp.eq.s32.totalorder %s21, 1
      %p91 = por %p89, %p90
      %p93 = scmp.ne.s32.totalorder %s76, %s92
      %p94 = scmp.eq.s32.totalorder %s21, 0
      %p95 = por %p93, %p94
      %p96 = scmp.le.s32.totalorder 1, %s15
      %p97 = scmp.lt.s32.totalorder %s15, 3
      %p98 = pnand %p96, %p97
      %p99 = pneg %p98
      // Predicated region
      $region9: #{tpu_custom_call.1} parent=5 // pred_check
        _
      $region10: #{tpu_custom_call.1} parent=5 // pred_check_branch
        %101 = sbr.rel (%p98) target = $region12
      $region11: #{tpu_custom_call.1} parent=5 // pred_region
        %s102 = ssub.s32 %s15, 1
        // Predicated region
        $region13: #{tpu_custom_call.1} parent=11 // pred_check
          %p103 = pneg %p36
        $region14: #{tpu_custom_call.1} parent=11 // pred_check_branch
          %105 = sbr.rel (%p103) target = $region16
        $region15: #{tpu_custom_call.1} parent=11 // pred_region
          %s107 = ssub.s32 64, 64
          %108 = vsyncadd [#allocation3], %s107
          %s110 = sshll.u32 [#allocation2], 4
          %s111 = int_to_ptr.vmem [resolvable:$true] %s110
          %113 = dma.hbm_to_vmem [thread:$0]  %s0, 64, %s111, [#allocation3]
        $region16: #{tpu_custom_call.1} parent=11 // pred_fallthru
          _
      $region12: #{tpu_custom_call.1} parent=5 // pred_fallthru
        _
      %p114 = scmp.lt.s32.totalorder %s15, 2
      // Predicated region
      $region17: #{tpu_custom_call.1} parent=5 // pred_check
        %p115 = pneg %p114
      $region18: #{tpu_custom_call.1} parent=5 // pred_check_branch
        %117 = sbr.rel (%p115) target = $region20
      $region19: #{tpu_custom_call.1} parent=5 // pred_region
        // Predicated region
        $region21: #{tpu_custom_call.1} parent=19 // pred_check
          %p118 = pneg %p56
        $region22: #{tpu_custom_call.1} parent=19 // pred_check_branch
          %120 = sbr.rel (%p118) target = $region24
        $region23: #{tpu_custom_call.1} parent=19 // pred_region
          %s121 = sand.u32 %s46, 1
          %s122 = scalar_lea.sflag [#allocation6], %s121
          %s123 = sand.u32 %s46, 1
          %s124 = smul.addr %s123, 96
          %s125 = scalar_lea.vmem [#allocation5], %s124
          %s126 = smul.u32 4, %s15
          %s128 = ssub.s32 1536, 1536
          %129 = vsyncadd %s122, %s128
          %s130 = smul.addr %s126, 64
          %s131 = scalar_lea.hbm %s1, %s130
          %s132 = sshll.u32 %s125, 4
          %s133 = int_to_ptr.vmem [resolvable:$true] %s132
          %138 = dma.hbm_to_vmem [thread:$0]  %s131, 1536, %s133, %s122, 512, 256, 16
        $region24: #{tpu_custom_call.1} parent=19 // pred_fallthru
          _
      $region20: #{tpu_custom_call.1} parent=5 // pred_fallthru
        _
      %p139 = scmp.le.s32.totalorder 1, %s15
      %p140 = scmp.lt.s32.totalorder %s15, 3
      %p141 = pnand %p139, %p140
      %p142 = pneg %p141
      // Predicated region
      $region25: #{tpu_custom_call.1} parent=5 // pred_check
        _
      $region26: #{tpu_custom_call.1} parent=5 // pred_check_branch
        %144 = sbr.rel (%p141) target = $region28
      $region27: #{tpu_custom_call.1} parent=5 // pred_region
        %s145 = ssub.s32 %s15, 1
        // Predicated region
        $region29: #{tpu_custom_call.1} parent=27 // pred_check
          %p146 = pneg %p36
        $region30: #{tpu_custom_call.1} parent=27 // pred_check_branch
          %148 = sbr.rel (%p146) target = $region32
        $region31: #{tpu_custom_call.1} parent=27 // pred_region
          %149 = dma.done [#allocation3], 64
        $region32: #{tpu_custom_call.1} parent=27 // pred_fallthru
          _
        %s150 = sand.u32 %s49, 1
        %s151 = scalar_lea.sflag [#allocation6], %s150
        %s152 = sand.u32 %s49, 1
        %s153 = smul.addr %s152, 96
        %s154 = scalar_lea.vmem [#allocation5], %s153
        // Predicated region
        $region33: #{tpu_custom_call.1} parent=27 // pred_check
          %p155 = pneg %p62
        $region34: #{tpu_custom_call.1} parent=27 // pred_check_branch
          %157 = sbr.rel (%p155) target = $region36
        $region35: #{tpu_custom_call.1} parent=27 // pred_region
          %158 = dma.done %s151, 1536
        $region36: #{tpu_custom_call.1} parent=27 // pred_fallthru
          _
        %p159 = pneg %p36
        %p160 = pneg %p33
        %s161 = sand.u32 %s49, 1
        %s162 = scalar_lea.sflag [#allocation6], %s161
        %s163 = sand.u32 %s49, 1
        %s164 = smul.addr %s163, 96
        %s165 = scalar_lea.vmem [#allocation5], %s164
        %p166 = pneg %p62
        %p167 = pneg %p59
        %p168 = pneg %p88
        %p169 = pneg %p85
        %s170 = sand.u32 %s75, 1
        %s171 = scalar_lea.sflag [#allocation4], %s170
        %s172 = sand.u32 %s75, 1
        %s173 = smul.addr %s172, 32
        %s174 = scalar_lea.vmem [#allocation7], %s173
        %s175 = smul.u32 4, %s20
        %s176 = smul.u32 4, %s20
        %v178 = vld [vmem:[#allocation2] sm:$0xf]
        %v179 = vld [vmem:[%s154] sm:$0xff]
        %v180 = vld [vmem:[%s154 + $0x8] sm:$0xff]
        %v181 = vld [vmem:[%s154 + $0x10] sm:$0xff]
        %v182 = vld [vmem:[%s154 + $0x18] sm:$0xff]
        %v183 = vld [vmem:[%s154 + $0x20] sm:$0xff]
        %v184 = vld [vmem:[%s154 + $0x28] sm:$0xff]
        %v185 = vld [vmem:[%s154 + $0x30] sm:$0xff]
        %v186 = vld [vmem:[%s154 + $0x38] sm:$0xff]
        %v187 = vld [vmem:[%s154 + $0x40] sm:$0xff]
        %v188 = vld [vmem:[%s154 + $0x48] sm:$0xff]
        %v189 = vld [vmem:[%s154 + $0x50] sm:$0x11]
        %v190 = vld [vmem:[%s154 + $0x58] sm:$0x11]
        %v203 = vunpack.c.l.b16 %v179
        %v204 = vunpack.c.h.b16 %v179
        %v205 = vunpack.c.l.b16 %v180
        %v206 = vunpack.c.h.b16 %v180
        %v207 = vunpack.c.l.b16 %v181
        %v208 = vunpack.c.h.b16 %v181
        %v209 = vunpack.c.l.b16 %v182
        %v210 = vunpack.c.h.b16 %v182
        %v211 = vunpack.c.l.b16 %v183
        %v212 = vunpack.c.h.b16 %v183
        %v213 = vunpack.c.l.b16 %v184
        %v214 = vunpack.c.h.b16 %v184
        %v215 = vunpack.c.l.b16 %v185
        %v216 = vunpack.c.h.b16 %v185
        %v217 = vunpack.c.l.b16 %v186
        %v218 = vunpack.c.h.b16 %v186
        %v219 = vunpack.c.l.b16 %v187
        %v220 = vunpack.c.h.b16 %v187
        %v221 = vunpack.c.l.b16 %v188
        %v222 = vunpack.c.h.b16 %v188
        %v223 = vunpack.c.l.b16 %v189
        %v224 = vunpack.c.h.b16 %v189
        %v225 = vunpack.c.l.b16 %v190
        %v226 = vunpack.c.h.b16 %v190
        %v227 = vpack.c.b16 %v207, %v203
        %v228 = vpack.c.b16 %v208, %v204
        %v229 = vpack.c.b16 %v209, %v205
        %v230 = vpack.c.b16 %v210, %v206
        %v231 = vpack.c.b16 %v215, %v211
        %v232 = vpack.c.b16 %v216, %v212
        %v233 = vpack.c.b16 %v217, %v213
        %v234 = vpack.c.b16 %v218, %v214
        %v235 = vpack.c.b16 %v223, %v219
        %v236 = vpack.c.b16 %v224, %v220
        %v237 = vpack.c.b16 %v225, %v221
        %v238 = vpack.c.b16 %v226, %v222
        %vm247 = vcmask 343040
        %v249 = vsel %vm247, %v178, 0
        %vm251 = vcmask 1044480
        %v253 = vsel %vm251, %v235, 0
        %v256 = vsel %vm251, %v236, 0
        %v259 = vsel %vm251, %v237, 0
        %v262 = vsel %vm251, %v238, 0
        %264 = vmatprep.subr.bf16.mxu0 0
        %265 = vmatpush1.bf16.msra.mxu0 0
        %266 = vmatprep.subr.bf16.mxu0 0
        %267 = vmatpush1.bf16.msra.mxu0 0
        %268 = vmatprep.subr.bf16.mxu0 0
        %269 = vmatpush1.bf16.msra.mxu0 0
        %270 = vmatprep.subr.bf16.mxu0 0
        %271 = vmatpush1.bf16.msra.mxu0 0
        %272 = vmatprep.subr.bf16.mxu0 0
        %273 = vmatpush1.bf16.msra.mxu0 0
        %274 = vmatprep.subr.bf16.mxu0 %v256
        %275 = vmatpush1.bf16.msra.mxu0 %v253
        %276 = vmatprep.subr.bf16.mxu0 %v232
        %277 = vmatpush1.bf16.msra.mxu0 %v231
        %278 = vmatprep.subr.bf16.mxu0 %v228
        %279 = vmatpush1.bf16.msra.mxu0 %v227
        %280 = vmatprep.subr.bf16.mxu0 0
        %281 = vmatpush2.bf16.msra.mxu0 0
        %282 = vmatprep.subr.bf16.mxu0 0
        %283 = vmatpush2.bf16.msra.mxu0 0
        %284 = vmatprep.subr.bf16.mxu0 0
        %285 = vmatpush2.bf16.msra.mxu0 0
        %286 = vmatprep.subr.bf16.mxu0 0
        %287 = vmatpush2.bf16.msra.mxu0 0
        %288 = vmatprep.subr.bf16.mxu0 0
        %289 = vmatpush2.bf16.msra.mxu0 0
        %290 = vmatprep.subr.bf16.mxu0 0
        %291 = vmatpush2.bf16.msra.mxu0 0
        %292 = vmatprep.subr.bf16.mxu0 0
        %293 = vmatpush2.bf16.msra.mxu0 0
        %294 = vmatprep.subr.bf16.mxu0 0
        %295 = vmatpush2.bf16.msra.mxu0 0
        %296 = vmatprep.mubr.bf16.mxu0 0
        %297 = vmatmul.mubr.bf16.gmra.mxu0 %v249
        %v298 = vpop.f32.mrf.mxu0
        %v299 = vadd.f32 0.0, %v298
        %v300 = vpop.f32.mrf.mxu0
        %v301 = vadd.f32 0.0, %v300
        %v302 = vpop.f32.mrf.mxu0
        %v303 = vpop.f32.mrf.mxu0
        %304 = vdwg.mxu0
        %305 = vmatprep.subr.bf16.mxu0 0
        %306 = vmatpush1.bf16.msra.mxu0 0
        %307 = vmatprep.subr.bf16.mxu0 0
        %308 = vmatpush1.bf16.msra.mxu0 0
        %309 = vmatprep.subr.bf16.mxu0 0
        %310 = vmatpush1.bf16.msra.mxu0 0
        %311 = vmatprep.subr.bf16.mxu0 0
        %312 = vmatpush1.bf16.msra.mxu0 0
        %313 = vmatprep.subr.bf16.mxu0 0
        %314 = vmatpush1.bf16.msra.mxu0 0
        %315 = vmatprep.subr.bf16.mxu0 %v262
        %316 = vmatpush1.bf16.msra.mxu0 %v259
        %317 = vmatprep.subr.bf16.mxu0 %v234
        %318 = vmatpush1.bf16.msra.mxu0 %v233
        %319 = vmatprep.subr.bf16.mxu0 %v230
        %320 = vmatpush1.bf16.msra.mxu0 %v229
        %321 = vmatprep.subr.bf16.mxu0 0
        %322 = vmatpush2.bf16.msra.mxu0 0
        %323 = vmatprep.subr.bf16.mxu0 0
        %324 = vmatpush2.bf16.msra.mxu0 0
        %325 = vmatprep.subr.bf16.mxu0 0
        %326 = vmatpush2.bf16.msra.mxu0 0
        %327 = vmatprep.subr.bf16.mxu0 0
        %328 = vmatpush2.bf16.msra.mxu0 0
        %329 = vmatprep.subr.bf16.mxu0 0
        %330 = vmatpush2.bf16.msra.mxu0 0
        %331 = vmatprep.subr.bf16.mxu0 0
        %332 = vmatpush2.bf16.msra.mxu0 0
        %333 = vmatprep.subr.bf16.mxu0 0
        %334 = vmatpush2.bf16.msra.mxu0 0
        %335 = vmatprep.subr.bf16.mxu0 0
        %336 = vmatpush2.bf16.msra.mxu0 0
        %337 = vmatprep.mubr.bf16.mxu0 0
        %338 = vmatmul.mubr.bf16.gmra.mxu0 %v249
        %v339 = vpop.f32.mrf.mxu0
        %v340 = vadd.f32 0.0, %v339
        %v341 = vpop.f32.mrf.mxu0
        %v342 = vadd.f32 0.0, %v341
        %v343 = vpop.f32.mrf.mxu0
        %v344 = vpop.f32.mrf.mxu0
        %345 = vdwg.mxu0
        %v346 = vmax.f32 %v299, 0.0
        %v347 = vmax.f32 %v301, 0.0
        %v348 = vmax.f32 %v340, 0.0
        %v349 = vmax.f32 %v342, 0.0
        %vm350 = vcmp.ge.f32.partialorder %v346, 6.0
        %vm351 = vcmp.ge.f32.partialorder %v347, 6.0
        %vm352 = vcmp.ge.f32.partialorder %v348, 6.0
        %vm353 = vcmp.ge.f32.partialorder %v349, 6.0
        %v354 = vmul.f32 %v346, 1.5
        %v355 = vmul.f32 %v347, 1.5
        %v356 = vmul.f32 %v348, 1.5
        %v357 = vmul.f32 %v349, 1.5
        %v358 = vadd.f32 %v354, 1.0
        %v359 = vadd.f32 %v355, 1.0
        %v360 = vadd.f32 %v356, 1.0
        %v361 = vadd.f32 %v357, 1.0
        %v362 = vlog2.pop %v358
        %v363 = vmul.f32 %v362, 0.6931472
        %v364 = vlog2.pop %v359
        %v365 = vmul.f32 %v364, 0.6931472
        %v366 = vlog2.pop %v360
        %v367 = vmul.f32 %v366, 0.6931472
        %v368 = vlog2.pop %v361
        %v369 = vmul.f32 %v368, 0.6931472
        %v370 = vadd.f32 %v363, 3.6974149
        %v371 = vadd.f32 %v365, 3.6974149
        %v372 = vadd.f32 %v367, 3.6974149
        %v373 = vadd.f32 %v369, 3.6974149
        %v374 = vsel %vm350, %v370, %v346
        %v375 = vsel %vm351, %v371, %v347
        %v376 = vsel %vm352, %v372, %v348
        %v377 = vsel %vm353, %v373, %v349
        %378 = vst [vmem:[%s174] sm:$0xff] %v374
        %379 = vst [vmem:[%s174 + $0x8] sm:$0xff] %v375
        %380 = vst [vmem:[%s174 + $0x10] sm:$0xff] %v376
        %381 = vst [vmem:[%s174 + $0x18] sm:$0xff] %v377
        %s382 = sand.u32 %s75, 1
        %s383 = scalar_lea.sflag [#allocation4], %s382
        %s384 = sand.u32 %s75, 1
        %s385 = smul.addr %s384, 32
        %s386 = scalar_lea.vmem [#allocation7], %s385
        // Predicated region
        $region37: #{tpu_custom_call.1} parent=27 // pred_check
          %p387 = pneg %p85
        $region38: #{tpu_custom_call.1} parent=27 // pred_check_branch
          %389 = sbr.rel (%p387) target = $region40
        $region39: #{tpu_custom_call.1} parent=27 // pred_region
          %s390 = smul.u32 4, %s20
          %s392 = ssub.s32 512, 512
          %393 = vsyncadd %s383, %s392
          %s394 = smul.addr %s390, 128
          %s395 = scalar_lea.hbm %s2, %s394
          %s397 = sshll.u32 %s386, 4
          %s398 = int_to_ptr.vmem [resolvable:$true] %s397
          %400 = dma.vmem_to_hbm [thread:$0]  %s398, 512, %s395, %s383
        $region40: #{tpu_custom_call.1} parent=27 // pred_fallthru
          _
      $region28: #{tpu_custom_call.1} parent=5 // pred_fallthru
        _
      %p401 = scmp.le.s32.totalorder 2, %s15
      // Predicated region
      $region41: #{tpu_custom_call.1} parent=5 // pred_check
        %p402 = pneg %p401
      $region42: #{tpu_custom_call.1} parent=5 // pred_check_branch
        %404 = sbr.rel (%p402) target = $region44
      $region43: #{tpu_custom_call.1} parent=5 // pred_region
        %s405 = ssub.s32 %s15, 2
        // Predicated region
        $region45: #{tpu_custom_call.1} parent=43 // pred_check
          %p406 = pneg %p91
        $region46: #{tpu_custom_call.1} parent=43 // pred_check_branch
          %408 = sbr.rel (%p406) target = $region48
        $region47: #{tpu_custom_call.1} parent=43 // pred_region
          %s409 = sand.u32 %s76, 1
          %s410 = scalar_lea.sflag [#allocation4], %s409
          %s411 = sand.u32 %s76, 1
          %s412 = smul.addr %s411, 32
          %s413 = scalar_lea.vmem [#allocation7], %s412
          %414 = dma.done %s410, 512
        $region48: #{tpu_custom_call.1} parent=43 // pred_fallthru
          _
      $region44: #{tpu_custom_call.1} parent=5 // pred_fallthru
        _
    $region6: #{tpu_custom_call.1} parent=1 // loop_footer
      %s19 = sadd.s32 1, %s15
    $region7: #{tpu_custom_call.1} parent=1 // loop_footer_branch
      %14 = sbr.rel target = $region3
    $region8: #{tpu_custom_call.1} parent=1 // loop_exit
      _
    %415 = vsyncpa [#allocation3], 1
    %s416 = scalar_lea.sflag [#allocation3], 1
    %417 = vsyncpa %s416, 1
    %418 = vsyncpa [#allocation6], 1
    %s419 = scalar_lea.sflag [#allocation6], 1
    %420 = vsyncpa %s419, 1
    %421 = vsyncpa [#allocation4], 1
    %s422 = scalar_lea.sflag [#allocation4], 1
    %423 = vsyncpa %s422, 1

</llo_original>
